<compile_context>
chip_gen: v5e
topology: v5e:2x2
jax: 0.10.0
libtpu: 0.0.40
codegen_flags: <defaults>
</compile_context>

<pallas_src>
import functools

import jax
import jax.numpy as jnp
from jax.experimental import pallas as pl
from jax.experimental.pallas import tpu as pltpu

_LANES = 128
_SUBLANES = 8


def _rmsle_kernel(pred_ref, act_ref, out_ref, acc_ref, *, total_count):
    i = pl.program_id(0)

    @pl.when(i == 0)
    def _():
        acc_ref[...] = jnp.zeros_like(acc_ref)

    # Elementwise hot path: clamp, log1p, squared diff. All VPU/EUP work.
    p = jnp.maximum(pred_ref[...], 0.0)
    diff = jnp.log1p(p) - jnp.log1p(act_ref[...])
    sq = diff * diff

    # Lane-parallel partial reduce into a single vreg-shaped accumulator:
    # (tile_rows, 128) -> (tile_rows/8, 8, 128), summed over the leading axis.
    # This is just a chain of VPU vreg adds (no cross-lane XLU traffic).
    tr = sq.shape[0]
    acc_ref[...] += jnp.sum(sq.reshape(tr // _SUBLANES, _SUBLANES, _LANES), axis=0)

    # Final cross-lane reduce + sqrt only once, on the last grid step.
    @pl.when(i == pl.num_programs(0) - 1)
    def _():
        total = jnp.sum(acc_ref[...])
        out_ref[0, 0] = jnp.sqrt(total / jnp.float32(total_count))


def _round_up(x, n):
    return ((x + n - 1) // n) * n


def rmsle_loss(pred, actual, *, tile_rows=2048):
    """RMSLE loss via a Pallas TPU streaming-reduction kernel.

    pred / actual: arrays of identical (arbitrary) shape. Returns scalar f32.
    """
    assert pred.shape == actual.shape
    pred = jnp.asarray(pred, jnp.float32).reshape(-1)
    actual = jnp.asarray(actual, jnp.float32).reshape(-1)

    total = pred.size  # true element count (mean divisor)

    # Row count (sublane axis), rounded up to a multiple of 8.
    m = _round_up(pl.cdiv(total, _LANES), _SUBLANES)
    # Block rows: large for bandwidth, but never larger than the input itself,
    # and always a multiple of 8 so the (8,128) accumulator reshape is exact.
    tile_rows = _round_up(min(tile_rows, m), _SUBLANES)
    m_padded = _round_up(m, tile_rows)

    padded_total = m_padded * _LANES
    if padded_total != total:
        pad = padded_total - total
        # Zero padding on both tensors -> log1p(0)-log1p(0)=0 contribution.
        pred = jnp.pad(pred, (0, pad))
        actual = jnp.pad(actual, (0, pad))

    pred2d = pred.reshape(m_padded, _LANES)
    act2d = actual.reshape(m_padded, _LANES)

    grid = (m_padded // tile_rows,)
    kernel = functools.partial(_rmsle_kernel, total_count=total)

    out = pl.pallas_call(
        kernel,
        out_shape=jax.ShapeDtypeStruct((1, 1), jnp.float32),
        grid_spec=pltpu.PrefetchScalarGridSpec(
            num_scalar_prefetch=0,
            grid=grid,
            in_specs=[
                pl.BlockSpec((tile_rows, _LANES), lambda i: (i, 0)),
                pl.BlockSpec((tile_rows, _LANES), lambda i: (i, 0)),
            ],
            out_specs=pl.BlockSpec(memory_space=pltpu.MemorySpace.SMEM),
            scratch_shapes=[pltpu.VMEM((_SUBLANES, _LANES), jnp.float32)],
        ),
        compiler_params=pltpu.CompilerParams(
            # Single carried accumulator -> reduction axis is sequential.
            dimension_semantics=("arbitrary",),
            # 2 inputs x 2 buffers x 1 MiB blocks = 4 MiB; comfortably under
            # the scoped limit on v5e/v6e/v7x, but state it explicitly.
            vmem_limit_bytes=32 * 1024 * 1024,
        ),
    )(pred2d, act2d)

    return out[0, 0]


if __name__ == "__main__":
    key = jax.random.PRNGKey(0)
    k1, k2 = jax.random.split(key)

    # Small, representative shape: batch=2, channels=4, spatial=16x16.
    shape = (2, 4, 16, 16)
    # pred has some negative entries to exercise the clamp; actual >= 0.
    pred = jax.random.normal(k1, shape, dtype=jnp.float32)
    actual = jax.random.uniform(k2, shape, dtype=jnp.float32, minval=0.0, maxval=5.0)

    loss = rmsle_loss(pred, actual)
    jax.block_until_ready(loss)

    # Pure-JAX reference check (same semantics as the PyTorch module).
    p_ref = jnp.maximum(pred, 0.0)
    ref = jnp.sqrt(jnp.mean((jnp.log1p(p_ref) - jnp.log1p(actual)) ** 2))
    assert jnp.allclose(loss, ref, rtol=1e-5, atol=1e-6), (loss, ref)

    print("KERNEL_OK")
</pallas_src>

<mosaic_0001>
module attributes {stable_mosaic.version = 11 : i64} {
  func.func @_rmsle_kernel(%arg0: i32, %arg1: memref<16x128xf32, #tpu.memory_space<vmem>>, %arg2: memref<16x128xf32, #tpu.memory_space<vmem>>, %arg3: memref<1x1xf32, #tpu.memory_space<smem>>, %arg4: memref<8x128xf32, #tpu.memory_space<vmem>>) attributes {dimension_semantics = [#tpu.dimension_semantics<arbitrary>], iteration_bounds = array<i64: 1>, scalar_prefetch = 0 : i64, scratch_operands = 1 : i64, tpu.core_type = #tpu.core_type<tc>, window_params = [{transform_indices = @transform_0, window_bounds = array<i64: 16, 128>}, {transform_indices = @transform_1, window_bounds = array<i64: 16, 128>}, {transform_indices = @transform_2, window_bounds = array<i64: 1, 1>}]} {
    %c0_i32 = arith.constant 0 : i32
    %0 = arith.cmpi eq, %arg0, %c0_i32 : i32
    %1 = arith.extui %0 : i1 to i32
    %c0_i32_0 = arith.constant 0 : i32
    %2 = arith.cmpi ne, %1, %c0_i32_0 : i32
    scf.if %2 {
      %cst_11 = arith.constant 0.000000e+00 : f32
      %19 = vector.broadcast %cst_11 : f32 to vector<8x128xf32>
      %c0_12 = arith.constant 0 : index
      %c0_13 = arith.constant 0 : index
      %20 = vector.load %arg4[%c0_12, %c0_13] : memref<8x128xf32, #tpu.memory_space<vmem>>, vector<8x128xf32>
      tpu.vector_store %arg4[%c0_12, %c0_13], %19 {strides = array<i32>} : memref<8x128xf32, #tpu.memory_space<vmem>>, vector<8x128xf32>,
    } else {
    }
    %c0 = arith.constant 0 : index
    %c0_1 = arith.constant 0 : index
    %3 = vector.load %arg1[%c0, %c0_1] : memref<16x128xf32, #tpu.memory_space<vmem>>, vector<16x128xf32>
    %cst = arith.constant 0.000000e+00 : f32
    %4 = vector.broadcast %cst : f32 to vector<16x128xf32>
    %5 = arith.maximumf %3, %4 : vector<16x128xf32>
    %6 = math.log1p %5 : vector<16x128xf32>
    %c0_2 = arith.constant 0 : index
    %c0_3 = arith.constant 0 : index
    %7 = vector.load %arg2[%c0_2, %c0_3] : memref<16x128xf32, #tpu.memory_space<vmem>>, vector<16x128xf32>
    %8 = math.log1p %7 : vector<16x128xf32>
    %9 = arith.subf %6, %8 : vector<16x128xf32>
    %10 = arith.mulf %9, %9 : vector<16x128xf32>
    %c0_4 = arith.constant 0 : index
    %c0_5 = arith.constant 0 : index
    %11 = vector.load %arg4[%c0_4, %c0_5] : memref<8x128xf32, #tpu.memory_space<vmem>>, vector<8x128xf32>
    %12 = vector.shape_cast %10 : vector<16x128xf32> to vector<2x8x128xf32>
    %cst_6 = arith.constant dense<0.000000e+00> : vector<8x128xf32>
    %13 = vector.multi_reduction <add>, %12, %cst_6 [0] : vector<2x8x128xf32> to vector<8x128xf32>
    %14 = arith.addf %11, %13 : vector<8x128xf32>
    %c0_7 = arith.constant 0 : index
    %c0_8 = arith.constant 0 : index
    %15 = vector.load %arg4[%c0_7, %c0_8] : memref<8x128xf32, #tpu.memory_space<vmem>>, vector<8x128xf32>
    tpu.vector_store %arg4[%c0_7, %c0_8], %14 {strides = array<i32>} : memref<8x128xf32, #tpu.memory_space<vmem>>, vector<8x128xf32>,
    %c0_i32_9 = arith.constant 0 : i32
    %16 = arith.cmpi eq, %arg0, %c0_i32_9 : i32
    %17 = arith.extui %16 : i1 to i32
    %c0_i32_10 = arith.constant 0 : i32
    %18 = arith.cmpi ne, %17, %c0_i32_10 : i32
    scf.if %18 {
      %c0_11 = arith.constant 0 : index
      %c0_12 = arith.constant 0 : index
      %19 = vector.load %arg4[%c0_11, %c0_12] : memref<8x128xf32, #tpu.memory_space<vmem>>, vector<8x128xf32>
      %20 = vector.shape_cast %19 : vector<8x128xf32> to vector<1x8x128xf32>
      %cst_13 = arith.constant dense<0.000000e+00> : vector<1xf32>
      %21 = vector.multi_reduction <add>, %20, %cst_13 [1, 2] : vector<1x8x128xf32> to vector<1xf32>
      %22 = vector.shape_cast %21 : vector<1xf32> to vector<1x1x1xf32>
      %23 = vector.extract %22[0, 0, 0] : f32 from vector<1x1x1xf32>
      %cst_14 = arith.constant 2.048000e+03 : f32
      %24 = arith.divf %23, %cst_14 : f32
      %25 = math.sqrt %24 : f32
      %c0_15 = arith.constant 0 : index
      %c0_16 = arith.constant 0 : index
      %26 = memref.load %arg3[%c0_15, %c0_16] : memref<1x1xf32, #tpu.memory_space<smem>>
      memref.store %25, %arg3[%c0_15, %c0_16] : memref<1x1xf32, #tpu.memory_space<smem>>
    } else {
    }
    return
  }
  func.func @transform_0(%arg0: i32) -> (i32, i32) {
    %c0_i32 = arith.constant 0 : i32
    %c0_i32_0 = arith.constant 0 : i32
    return %arg0, %c0_i32 : i32, i32
  }
  func.func @transform_1(%arg0: i32) -> (i32, i32) {
    %c0_i32 = arith.constant 0 : i32
    %c0_i32_0 = arith.constant 0 : i32
    return %arg0, %c0_i32 : i32, i32
  }
  func.func @transform_2(%arg0: i32) -> (i32, i32) {
    %c0_i32 = arith.constant 0 : i32
    %c0_i32_0 = arith.constant 0 : i32
    %c0_i32_1 = arith.constant 0 : i32
    return %c0_i32, %c0_i32_0 : i32, i32
  }
}

</mosaic_0001>

<llo_original>
// kernel: tpu_custom_call.1
$region0: #{tpu_custom_call.1}
  #allocation0 [shape = 'u32[]', space=smem, size = 0x4, offset = 0x4, fixed_abs, tag = 'smem constant byte address 0x4 - core index']
  #allocation1 [shape = 'u32[72,128]{1,0:T(1,128)}', space=vmem, size = 0x9000, scoped, tag = 'internal scratch']
  #allocation2 [shape = 'f32[8,128]{1,0:T(8,128)}', space=vmem, size = 0x1000, scoped, tag = 'scratch operand']
  %s0 = inlined_call_operand.hbm [shape: f32[16,128], index: 0, kind: input, shape index: {}]
  %s1 = inlined_call_operand.hbm [shape: f32[16,128], index: 1, kind: input, shape index: {}]
  %s2 = inlined_call_operand.hbm [shape: f32[1,1], index: 2, kind: output, shape index: {}]
  %s3 = sld [smem:[#allocation0]]
  $region34: #{tpu_custom_call.1} parent=0
    _
  %s5 = ssub.s32 1, %s3
  %s6 = scalar_select 0, %s5, %s3
  $region1: #{tpu_custom_call.1} parent=0
    #allocation3 [shape = 'u8[8192]{0}', space=vmem, size = 0x2000, scoped, tag = 'input window, operand 0, single buffered']
    #allocation4 [shape = 's32[1]{0}', space=sflag, size = 0x4, scoped, tag = 'scoped memory for tpu_custom_call.1']
    #allocation5 [shape = 's32[1]{0}', space=sflag, size = 0x4, scoped, tag = 'scoped memory for tpu_custom_call.1']
    #allocation6 [shape = 'u8[8192]{0}', space=vmem, size = 0x2000, scoped, tag = 'input window, operand 1, single buffered']
    #allocation7 [shape = 's32[1]{0}', space=sflag, size = 0x4, scoped, tag = 'scoped memory for tpu_custom_call.1']
    #allocation8 [shape = 'u8[512]{0}', space=smem, size = 0x200, scoped, tag = 'output window, operand 0, single buffered']
    %7 = vsyncpa [#allocation4], 0
    %8 = vsyncpa [#allocation7], 0
    %9 = vsyncpa [#allocation5], 0
    // Predicated region
    $region2: #{tpu_custom_call.1} parent=1 // pred_check
      _
    $region3: #{tpu_custom_call.1} parent=1 // pred_check_branch
      %11 = sbr.rel (0) target = $region5
    $region4: #{tpu_custom_call.1} parent=1 // pred_region
      %13 = vsyncadd [#allocation4], 0
      %s14 = sshll.u32 %s0, 4
      %s15 = int_to_ptr.hbm [resolvable:$true] %s14
      %s16 = sshll.u32 [#allocation3], 4
      %s17 = int_to_ptr.vmem [resolvable:$true] %s16
      %22 = dma.hbm_to_vmem [thread:$0]  %s15, 256, %s17, [#allocation4], 128, 128, 8
    $region5: #{tpu_custom_call.1} parent=1 // pred_fallthru
      _
    // Predicated region
    $region6: #{tpu_custom_call.1} parent=1 // pred_check
      _
    $region7: #{tpu_custom_call.1} parent=1 // pred_check_branch
      %24 = sbr.rel (0) target = $region9
    $region8: #{tpu_custom_call.1} parent=1 // pred_region
      %26 = vsyncadd [#allocation7], 0
      %s27 = sshll.u32 %s1, 4
      %s28 = int_to_ptr.hbm [resolvable:$true] %s27
      %s29 = sshll.u32 [#allocation6], 4
      %s30 = int_to_ptr.vmem [resolvable:$true] %s29
      %35 = dma.hbm_to_vmem [thread:$0]  %s28, 256, %s30, [#allocation7], 128, 128, 8
    $region9: #{tpu_custom_call.1} parent=1 // pred_fallthru
      _
    // Predicated region
    $region10: #{tpu_custom_call.1} parent=1 // pred_check
      _
    $region11: #{tpu_custom_call.1} parent=1 // pred_check_branch
      %37 = sbr.rel (0) target = $region13
    $region12: #{tpu_custom_call.1} parent=1 // pred_region
      %39 = dma.done [#allocation4], 256
    $region13: #{tpu_custom_call.1} parent=1 // pred_fallthru
      _
    // Predicated region
    $region14: #{tpu_custom_call.1} parent=1 // pred_check
      _
    $region15: #{tpu_custom_call.1} parent=1 // pred_check_branch
      %41 = sbr.rel (0) target = $region17
    $region16: #{tpu_custom_call.1} parent=1 // pred_region
      %43 = dma.done [#allocation7], 256
    $region17: #{tpu_custom_call.1} parent=1 // pred_fallthru
      _
    %p44 = scmp.eq.s32.totalorder 0, 0
    // Predicated region
    $region18: #{tpu_custom_call.1} parent=1 // pred_check
      %p45 = pneg %p44
    $region19: #{tpu_custom_call.1} parent=1 // pred_check_branch
      %47 = sbr.rel (%p45) target = $region21
    $region20: #{tpu_custom_call.1} parent=1 // pred_region
      %48 = vst [vmem:[#allocation2] sm:$0xff] 0.0
    $region21: #{tpu_custom_call.1} parent=1 // pred_fallthru
      _
    %v49 = vld [vmem:[#allocation3] sm:$0xff]
    %v50 = vld [vmem:[#allocation3 + $0x8] sm:$0xff]
    %v51 = vmax.f32 %v49, 0.0
    %v52 = vmax.f32 %v50, 0.0
    %v53 = vadd.f32 %v51, 1.0
    %v54 = vlog2.pop %v53
    %v55 = vmul.f32 %v54, 0.6931472
    %v56 = vmul.f32 -0.5, %v51
    %v57 = vadd.f32 %v56, 1.0
    %v58 = vmul.f32 %v57, %v51
    %v59 = vand.u32 2147483647, %v51
    %vm60 = vcmp.lt.f32.partialorder %v59, 0.0004427343
    %v61 = vsel %vm60, %v58, %v55
    %v62 = vadd.f32 %v52, 1.0
    %v63 = vlog2.pop %v62
    %v64 = vmul.f32 %v63, 0.6931472
    %v65 = vmul.f32 -0.5, %v52
    %v66 = vadd.f32 %v65, 1.0
    %v67 = vmul.f32 %v66, %v52
    %v68 = vand.u32 2147483647, %v52
    %vm69 = vcmp.lt.f32.partialorder %v68, 0.0004427343
    %v70 = vsel %vm69, %v67, %v64
    %v71 = vld [vmem:[#allocation6] sm:$0xff]
    %v72 = vld [vmem:[#allocation6 + $0x8] sm:$0xff]
    %v73 = vadd.f32 %v71, 1.0
    %v74 = vlog2.pop %v73
    %v75 = vmul.f32 %v74, 0.6931472
    %v76 = vmul.f32 -0.5, %v71
    %v77 = vadd.f32 %v76, 1.0
    %v78 = vmul.f32 %v77, %v71
    %v79 = vand.u32 2147483647, %v71
    %vm80 = vcmp.lt.f32.partialorder %v79, 0.0004427343
    %v81 = vsel %vm80, %v78, %v75
    %v82 = vadd.f32 %v72, 1.0
    %v83 = vlog2.pop %v82
    %v84 = vmul.f32 %v83, 0.6931472
    %v85 = vmul.f32 -0.5, %v72
    %v86 = vadd.f32 %v85, 1.0
    %v87 = vmul.f32 %v86, %v72
    %v88 = vand.u32 2147483647, %v72
    %vm89 = vcmp.lt.f32.partialorder %v88, 0.0004427343
    %v90 = vsel %vm89, %v87, %v84
    %v91 = vsub.f32 %v61, %v81
    %v92 = vsub.f32 %v70, %v90
    %v93 = vmul.f32 %v91, %v91
    %v94 = vmul.f32 %v92, %v92
    %v95 = vld [vmem:[#allocation2] sm:$0xff]
    %v96 = vadd.f32 %v93, %v94
    %v97 = vadd.f32 %v95, %v96
    %98 = vst [vmem:[#allocation2] sm:$0xff] %v97
    // Predicated region
    $region22: #{tpu_custom_call.1} parent=1 // pred_check
      %p99 = pneg %p44
    $region23: #{tpu_custom_call.1} parent=1 // pred_check_branch
      %101 = sbr.rel (%p99) target = $region25
    $region24: #{tpu_custom_call.1} parent=1 // pred_region
      %v102 = vld [vmem:[#allocation2] sm:$0xff]
      %103 = vadd.xlane.f32.xlu0 %v102
      %v104 = vpop.xlane.xlu0 %103
      %v105 = vrot.slane %v104, 4
      %v106 = vadd.f32 %v104, %v105
      %v107 = vrot.slane %v106, 2
      %v108 = vadd.f32 %v106, %v107
      %v109 = vrot.slane %v108, 1
      %v110 = vadd.f32 %v108, %v109
      %s111 = vtos %v110
      %v112 = vrcp.pop 2048.0
      %v113 = vmul.f32 2048.0, %v112
      %v114 = vsub.f32 1.0, %v113
      %v115 = vmul.f32 %v112, %v114
      %v116 = vadd.f32 %v112, %v115
      %vm117 = vweird.f32 %v112
      %v118 = vsel %vm117, %v112, %v116
      %s119 = vtos %v118
      %s120 = smul.f32 %s111, %s119
      %v121 = vstv %s120
      %v122 = vrsqrt.pop %v121
      %v123 = vmul.f32 %v122, %v121
      %v124 = vmul.f32 %v123, %v122
      %v125 = vmul.f32 0.5, %v124
      %v126 = vsub.f32 1.5, %v125
      %v127 = vmul.f32 %v122, %v126
      %v128 = vmul.f32 %v121, %v127
      %vm129 = vcmp.eq.f32.partialorder %v121, inf
      %v130 = vsel %vm129, %v121, %v128
      %vm131 = vcmp.eq.f32.partialorder %v121, 0.0
      %v132 = vand.u32 %v121, 2147483648
      %v133 = vsel %vm131, %v132, %v130
      %s134 = vtos %v133
      %s135 = scalar_lea.smem [#allocation8], 0
      %136 = sst [smem:[%s135]] %s134
    $region25: #{tpu_custom_call.1} parent=1 // pred_fallthru
      _
    // Predicated region
    $region26: #{tpu_custom_call.1} parent=1 // pred_check
      _
    $region27: #{tpu_custom_call.1} parent=1 // pred_check_branch
      %138 = sbr.rel (0) target = $region29
    $region28: #{tpu_custom_call.1} parent=1 // pred_region
      %140 = vsyncadd [#allocation5], 0
      %s142 = sshll.u32 %s2, 4
      %s143 = int_to_ptr.hbm [resolvable:$true] %s142
      %145 = dma.smem_to_hbm [#allocation8], 16, %s143, [#allocation5]
    $region29: #{tpu_custom_call.1} parent=1 // pred_fallthru
      _
    // Predicated region
    $region30: #{tpu_custom_call.1} parent=1 // pred_check
      _
    $region31: #{tpu_custom_call.1} parent=1 // pred_check_branch
      %147 = sbr.rel (0) target = $region33
    $region32: #{tpu_custom_call.1} parent=1 // pred_region
      %149 = dma.done [#allocation5], 16
    $region33: #{tpu_custom_call.1} parent=1 // pred_fallthru
      _
    %150 = sfence
    %151 = vsyncpa [#allocation4], 1
    %152 = vsyncpa [#allocation7], 1
    %153 = vsyncpa [#allocation5], 1

</llo_original>
